<compile_context>
chip_gen: v6e
topology: v6e:2x2x1
jax: 0.10.0
libtpu: 0.0.40
codegen_flags: <defaults>
</compile_context>

<pallas_src>
import math

import jax
import jax.numpy as jnp
from jax.experimental import pallas as pl
from jax.experimental.pallas import tpu as pltpu


def _drop_path_kernel(x_ref, scale_ref, o_ref):
    # x_ref: (8, tn) tile of 8 samples; scale_ref: (8, 1) per-sample scale
    # (0.0 for dropped samples, 1/keep_prob for kept ones).
    s = scale_ref[...].astype(x_ref.dtype)          # stay in native dtype
    o_ref[...] = (x_ref[...] * s).astype(o_ref.dtype)


def _pick_tile(n, itemsize):
    """Lane-dense tile (multiple of 128) targeting ~2 MiB per (8, tn) block."""
    n128 = pl.cdiv(n, 128) * 128                    # smallest lane-dense cover of n
    target = max(128, ((2 * 1024 * 1024) // (8 * itemsize)) // 128 * 128)
    return min(n128, target)


def drop_path(x, drop_prob, seed, training=True, donate=False):
    """Pallas TPU DropPath.  `drop_prob` / `training` / `donate` are static."""
    if drop_prob is None or float(drop_prob) == 0.0 or not training:
        return x
    keep_prob = 1.0 - float(drop_prob)

    b = x.shape[0]
    n = int(math.prod(x.shape[1:])) if x.ndim > 1 else 1
    xf = x.reshape(b, n)

    # Per-sample keep/drop decision, hoisted out of the kernel (trivial cost).
    # torch semantics: floor(keep_prob + U[0,1)) -> 1 keep, 0 drop.
    key = jax.random.PRNGKey(seed)
    u = jax.random.uniform(key, (b, 1), dtype=jnp.float32)
    scale = jnp.floor(jnp.float32(keep_prob) + u) * jnp.float32(1.0 / keep_prob)

    itemsize = jnp.dtype(x.dtype).itemsize
    tn = _pick_tile(n, itemsize)
    bs = 8                                           # sublane-dense batch block
    grid = (pl.cdiv(b, bs), pl.cdiv(n, tn))          # ragged edges handled by Pallas

    out = pl.pallas_call(
        _drop_path_kernel,
        out_shape=jax.ShapeDtypeStruct((b, n), x.dtype),
        grid=grid,
        in_specs=[
            pl.BlockSpec((bs, tn), lambda i, j: (i, j)),   # x tile
            pl.BlockSpec((bs, 1), lambda i, j: (i, 0)),    # per-sample scale column
        ],
        out_specs=pl.BlockSpec((bs, tn), lambda i, j: (i, j)),
        input_output_aliases=({0: 0} if donate else {}),
        compiler_params=pltpu.CompilerParams(
            dimension_semantics=("parallel", "parallel"),
            vmem_limit_bytes=32 * 1024 * 1024,
        ),
    )(xf, scale)

    return out.reshape(x.shape)


if __name__ == "__main__":
    key = jax.random.PRNGKey(0)
    k1, k2, k3 = jax.random.split(key, 3)

    fn = jax.jit(drop_path, static_argnames=("drop_prob", "training", "donate"))

    # Case 1: training mode, per-sample stochastic depth.
    B, C, H, W = 2, 4, 16, 16
    x = jax.random.normal(k1, (B, C, H, W), jnp.float32)
    drop_prob = 0.25
    out = fn(x, drop_prob=drop_prob, seed=jnp.int32(1234), training=True)
    jax.block_until_ready(out)

    assert out.shape == x.shape, out.shape
    assert bool(jnp.all(jnp.isfinite(out)))
    xs = x / (1.0 - drop_prob)
    for bi in range(B):
        dropped = bool(jnp.max(jnp.abs(out[bi])) < 1e-6)
        kept = bool(jnp.max(jnp.abs(out[bi] - xs[bi])) < 1e-4)
        assert dropped or kept, f"sample {bi}: not a valid DropPath output"

    # Case 2: non-128-multiple trailing size exercises the ragged-lane path
    # (Pallas masks boundary-block OOB writes; no wrapper pad / slice).
    x2 = jax.random.normal(k2, (2, 3, 10, 7), jnp.float32)
    out2 = fn(x2, drop_prob=0.5, seed=jnp.int32(7), training=True)
    jax.block_until_ready(out2)
    x2s = x2 / 0.5
    for bi in range(2):
        dropped = bool(jnp.max(jnp.abs(out2[bi])) < 1e-6)
        kept = bool(jnp.max(jnp.abs(out2[bi] - x2s[bi])) < 1e-4)
        assert dropped or kept, f"sample {bi}: not a valid DropPath output"

    # Case 3: batch not a multiple of 8 exercises the ragged-batch (sublane) path.
    x3 = jax.random.normal(k3, (9, 4, 8, 8), jnp.float32)
    out3 = fn(x3, drop_prob=0.3, seed=jnp.int32(42), training=True)
    jax.block_until_ready(out3)
    x3s = x3 / 0.7
    for bi in range(9):
        dropped = bool(jnp.max(jnp.abs(out3[bi])) < 1e-6)
        kept = bool(jnp.max(jnp.abs(out3[bi] - x3s[bi])) < 1e-4)
        assert dropped or kept, f"sample {bi}: not a valid DropPath output"

    # Inference mode and drop_prob == 0: identity, no kernel launched
    # (matches the PyTorch reference which returns x unchanged).
    out_eval = drop_path(x, drop_prob, seed=0, training=False)
    assert out_eval is x
    out_p0 = drop_path(x, 0.0, seed=0, training=True)
    assert out_p0 is x

    print("KERNEL_OK")
</pallas_src>

<mosaic_0001>
module attributes {stable_mosaic.version = 11 : i64} {
  func.func @_drop_path_kernel(%arg0: i32, %arg1: i32, %arg2: memref<8x1024xf32, #tpu.memory_space<vmem>>, %arg3: memref<8x1xf32, #tpu.memory_space<vmem>>, %arg4: memref<8x1024xf32, #tpu.memory_space<vmem>>) attributes {dimension_semantics = [#tpu.dimension_semantics<parallel>, #tpu.dimension_semantics<parallel>], iteration_bounds = array<i64: 1, 1>, scalar_prefetch = 0 : i64, scratch_operands = 0 : i64, tpu.core_type = #tpu.core_type<tc>, window_params = [{transform_indices = @transform_0, window_bounds = array<i64: 8, 1024>}, {transform_indices = @transform_1, window_bounds = array<i64: 8, 1>}, {transform_indices = @transform_2, window_bounds = array<i64: 8, 1024>}]} {
    %c0 = arith.constant 0 : index
    %c0_0 = arith.constant 0 : index
    %0 = vector.load %arg3[%c0, %c0_0] : memref<8x1xf32, #tpu.memory_space<vmem>>, vector<8x1xf32>
    %c0_1 = arith.constant 0 : index
    %c0_2 = arith.constant 0 : index
    %1 = vector.load %arg2[%c0_1, %c0_2] : memref<8x1024xf32, #tpu.memory_space<vmem>>, vector<8x1024xf32>
    %2 = vector.broadcast %0 : vector<8x1xf32> to vector<8x1024xf32>
    %3 = arith.mulf %1, %2 : vector<8x1024xf32>
    %c0_3 = arith.constant 0 : index
    %c0_4 = arith.constant 0 : index
    %4 = vector.load %arg4[%c0_3, %c0_4] : memref<8x1024xf32, #tpu.memory_space<vmem>>, vector<8x1024xf32>
    tpu.vector_store %arg4[%c0_3, %c0_4], %3 {strides = array<i32>} : memref<8x1024xf32, #tpu.memory_space<vmem>>, vector<8x1024xf32>,
    return
  }
  func.func @transform_0(%arg0: i32, %arg1: i32) -> (i32, i32) {
    %c0_i32 = arith.constant 0 : i32
    return %arg0, %arg1 : i32, i32
  }
  func.func @transform_1(%arg0: i32, %arg1: i32) -> (i32, i32) {
    %c0_i32 = arith.constant 0 : i32
    %c0_i32_0 = arith.constant 0 : i32
    return %arg0, %c0_i32 : i32, i32
  }
  func.func @transform_2(%arg0: i32, %arg1: i32) -> (i32, i32) {
    %c0_i32 = arith.constant 0 : i32
    return %arg0, %arg1 : i32, i32
  }
}

</mosaic_0001>

<llo_original>
// kernel: drop_path.1
$region0: #{drop_path.1}
  #allocation0 [shape = 'u32[]', space=smem, size = 0x4, offset = 0x4, fixed_abs, tag = 'smem constant byte address 0x4 - core index']
  #allocation1 [shape = 'u32[144,128]{1,0:T(1,128)}', space=vmem, size = 0x12000, scoped, tag = 'internal scratch']
  %s0 = inlined_call_operand.vmem [shape: f32[2,1024], index: 0, kind: input, shape index: {}]
  %s1 = inlined_call_operand.vmem [shape: f32[2,1], index: 1, kind: input, shape index: {}]
  %s2 = inlined_call_operand.vmem [shape: f32[2,1024], index: 2, kind: output, shape index: {}]
  %s3 = sld [smem:[#allocation0]]
  $region37: #{drop_path.1} parent=0
    _
  %s5 = ssub.s32 1, %s3
  %s6 = scalar_select 0, %s5, %s3
  $region1: #{drop_path.1} parent=0
    #allocation2 [shape = 'u8[32768]{0}', space=vmem, size = 0x8000, scoped, tag = 'output window, operand 0, single buffered']
    // Predicated region
    $region2: #{drop_path.1} parent=1 // pred_check
      _
    $region3: #{drop_path.1} parent=1 // pred_check_branch
      %8 = sbr.rel (0) target = $region5
    $region4: #{drop_path.1} parent=1 // pred_region
      _
    $region5: #{drop_path.1} parent=1 // pred_fallthru
      _
    // Predicated region
    $region6: #{drop_path.1} parent=1 // pred_check
      _
    $region7: #{drop_path.1} parent=1 // pred_check_branch
      %10 = sbr.rel (0) target = $region9
    $region8: #{drop_path.1} parent=1 // pred_region
      _
    $region9: #{drop_path.1} parent=1 // pred_fallthru
      _
    %v11 = vld [vmem:[%s1] sm:$0xff]
    %v12 = vld [vmem:[%s0] sm:$0xff]
    %v13 = vld [vmem:[%s0 + $0x8] sm:$0xff]
    %v14 = vld [vmem:[%s0 + $0x10] sm:$0xff]
    %v15 = vld [vmem:[%s0 + $0x18] sm:$0xff]
    %v16 = vld [vmem:[%s0 + $0x20] sm:$0xff]
    %v17 = vld [vmem:[%s0 + $0x28] sm:$0xff]
    %v18 = vld [vmem:[%s0 + $0x30] sm:$0xff]
    %v19 = vld [vmem:[%s0 + $0x38] sm:$0xff]
    %21 = vset.pattern.permute.xlu0 0
    %22 = vperm.xlu0 %21, %v11
    %v23 = vpop.permute.xlu0 %22
    %v25 = vunpack.c.l.s4 269488144
    %v26 = vunpack.c.0.s8 %v25
    %v27 = vlaneseq
    %v28 = vshrl.u32 %v27, 7
    %v29 = vsub.s32 %v26, %v28
    %v30 = vrot.slane %v23, %v29
    %v32 = vunpack.c.l.s4 842150450
    %v33 = vunpack.c.0.s8 %v32
    %v34 = vlaneseq
    %v35 = vshrl.u32 %v34, 7
    %v36 = vsub.s32 %v33, %v35
    %v37 = vrot.slane %v23, %v36
    %v39 = vunpack.c.l.s4 1414812756
    %v40 = vunpack.c.0.s8 %v39
    %v41 = vlaneseq
    %v42 = vshrl.u32 %v41, 7
    %v43 = vsub.s32 %v40, %v42
    %v44 = vrot.slane %v23, %v43
    %v46 = vunpack.c.l.s4 1987475062
    %v47 = vunpack.c.0.s8 %v46
    %v48 = vlaneseq
    %v49 = vshrl.u32 %v48, 7
    %v50 = vsub.s32 %v47, %v49
    %v51 = vrot.slane %v23, %v50
    %v56 = vmul.f32 %v12, %v30
    %v57 = vmul.f32 %v13, %v30
    %v58 = vmul.f32 %v14, %v37
    %v59 = vmul.f32 %v15, %v37
    %v60 = vmul.f32 %v16, %v44
    %v61 = vmul.f32 %v17, %v44
    %v62 = vmul.f32 %v18, %v51
    %v63 = vmul.f32 %v19, %v51
    %64 = vst [vmem:[#allocation2] sm:$0xff] %v56
    %65 = vst [vmem:[#allocation2 + $0x8] sm:$0xff] %v57
    %66 = vst [vmem:[#allocation2 + $0x10] sm:$0xff] %v58
    %67 = vst [vmem:[#allocation2 + $0x18] sm:$0xff] %v59
    %68 = vst [vmem:[#allocation2 + $0x20] sm:$0xff] %v60
    %69 = vst [vmem:[#allocation2 + $0x28] sm:$0xff] %v61
    %70 = vst [vmem:[#allocation2 + $0x30] sm:$0xff] %v62
    %71 = vst [vmem:[#allocation2 + $0x38] sm:$0xff] %v63
    // Predicated region
    $region10: #{drop_path.1} parent=1 // pred_check
      _
    $region11: #{drop_path.1} parent=1 // pred_check_branch
      %73 = sbr.rel (0) target = $region13
    $region12: #{drop_path.1} parent=1 // pred_region
      // Predicated region
      $region14: #{drop_path.1} parent=12 // pred_check
        _
      $region15: #{drop_path.1} parent=12 // pred_check_branch
        %75 = sbr.rel (0) target = $region17
      $region16: #{drop_path.1} parent=12 // pred_region
        // Predicated region
        $region18: #{drop_path.1} parent=16 // pred_check
          _
        $region19: #{drop_path.1} parent=16 // pred_check_branch
          %77 = sbr.rel (0) target = $region21
        $region20: #{drop_path.1} parent=16 // pred_region
          loop: start=0, step=1, limit=1
          $region22: #{drop_path.1} parent=20 // loop_pre_header
            _
          $region23: #{drop_path.1} parent=20 // loop_header
            %s79 = sphi 0, %s83
            %p80 = scmp.ge.s32.totalorder %s79, 1
            %s84 = sphi [#allocation2], [#allocation2]
            %s85 = sphi %s2, %s2
          $region24: #{drop_path.1} parent=20 // loop_header_branch
            %82 = sbr.rel (%p80) target = $region28
          $region25: #{drop_path.1} parent=20 // loop_body
            %v86 = vld [vmem:[%s84] sm:$0xff]
            %87 = vst [vmem:[%s85] sm:$0xff] %v86
            %v88 = vld [vmem:[%s84 + $0x8] sm:$0xff]
            %89 = vst [vmem:[%s85 + $0x8] sm:$0xff] %v88
          $region26: #{drop_path.1} parent=20 // loop_footer
            %s83 = sadd.s32 1, %s79
          $region27: #{drop_path.1} parent=20 // loop_footer_branch
            %78 = sbr.rel target = $region23
          $region28: #{drop_path.1} parent=20 // loop_exit
            _
        $region21: #{drop_path.1} parent=16 // pred_fallthru
          _
        // Predicated region
        $region29: #{drop_path.1} parent=16 // pred_check
          _
        $region30: #{drop_path.1} parent=16 // pred_check_branch
          %91 = sbr.rel target = $region32
        $region31: #{drop_path.1} parent=16 // pred_region
          _
        $region32: #{drop_path.1} parent=16 // pred_fallthru
          _
      $region17: #{drop_path.1} parent=12 // pred_fallthru
        _
      %92 = vnop
    $region13: #{drop_path.1} parent=1 // pred_fallthru
      _
    // Predicated region
    $region33: #{drop_path.1} parent=1 // pred_check
      _
    $region34: #{drop_path.1} parent=1 // pred_check_branch
      %94 = sbr.rel (0) target = $region36
    $region35: #{drop_path.1} parent=1 // pred_region
      _
    $region36: #{drop_path.1} parent=1 // pred_fallthru
      _

</llo_original>
